<compile_context>
chip_gen: v7x
topology: tpu7x:2x2x1
jax: 0.10.0
libtpu: 0.0.40
codegen_flags: <defaults>
</compile_context>

<pallas_src>
import functools

import jax
import jax.numpy as jnp
from jax.experimental import pallas as pl
from jax.experimental.pallas import tpu as pltpu

_HALO = 128  # lane granularity of the halo blocks (== TPU lane width)


def _conv_relu_norm_kernel(xl_ref, xm_ref, xr_ref, w_ref, p_ref, o_ref, *,
                           K, pad, eps, seq_len, mm_dtype):
    """One grid step = one (batch, time-tile) pair, NCT layout.

    xl_ref : (1, C_in, 128)      left halo (previous 128 lanes, clamped)
    xm_ref : (1, C_in, tile_T)   current time tile
    xr_ref : (1, C_in, 128)      right halo (next 128 lanes, clamped)
    w_ref  : (C_out, K*C_in+1)   conv taps stacked along contraction + bias col
    p_ref  : (C_out, 2)          packed [gamma | beta] (f32)
    o_ref  : (1, C_out, tile_T)  output tile
    """
    tile_t = o_ref.shape[2]
    j = pl.program_id(1)

    # (C_in, 128 + tile_T + 128) window; all three pieces are lane-aligned.
    window = jnp.concatenate([xl_ref[0], xm_ref[0], xr_ref[0]], axis=1)
    win_lanes = window.shape[1]

    # Lane mask: window lane l represents global time index j*tile_T - 128 + l.
    # Zeroing lanes outside [0, seq_len) implements the Conv1d "same" zero
    # padding at the left edge and kills garbage lanes from the ragged last
    # block / clamped halo fetches at the right edge.
    lane = jax.lax.broadcasted_iota(jnp.int32, (1, win_lanes), 1)
    gidx = lane + (j * tile_t - _HALO)
    window = jnp.where((gidx >= 0) & (gidx < seq_len), window, 0)

    # Stack the K lane-shifted tap windows along the contraction (sublane) axis,
    # plus a ones row that folds in the conv bias -> one MXU matmul with
    # contraction K*C_in + 1.
    taps = []
    for k in range(K):
        s = _HALO - pad + k                      # static lane offset of tap k
        if s % _HALO == 0:
            taps.append(window[:, s:s + tile_t])                 # aligned slice
        else:
            taps.append(pltpu.roll(window, shift=win_lanes - s, axis=1)[:, :tile_t])
    taps.append(jnp.ones((1, tile_t), dtype=window.dtype))       # bias row
    rhs = jnp.concatenate(taps, axis=0).astype(mm_dtype)         # (K*C_in+1, tile_T)

    acc = jnp.dot(w_ref[...], rhs, preferred_element_type=jnp.float32)
    acc = jnp.maximum(acc, 0.0)                  # bias already folded into matmul

    # LayerNorm over channels (sublane axis); centered two-pass variance.
    # TODO(synk): if a bundle dump shows the XLU/VPU slot saturated, these two
    # cross-sublane reductions can be moved onto the MXU as ones-row matmuls.
    gamma = p_ref[:, 0:1]
    beta = p_ref[:, 1:2]
    inv_c = 1.0 / acc.shape[0]
    mean = jnp.sum(acc, axis=0, keepdims=True) * inv_c
    centered = acc - mean
    var = jnp.sum(centered * centered, axis=0, keepdims=True) * inv_c
    out = centered * jax.lax.rsqrt(var + eps) * gamma + beta

    # TODO(synk): dropout is identity here (p=0.0 / eval mode); training parity
    # would need pltpu.prng_seed / pltpu.prng_random_bits masking.
    o_ref[0] = out.astype(o_ref.dtype)


def _round_up(x, m):
    return ((x + m - 1) // m) * m


def _vmem_estimate(tile_t, c_in, c_out, k, in_itemsize, mm_itemsize):
    """Rough per-step VMEM footprint (double-buffered I/O tiles + temporaries)."""
    lanes = tile_t + 2 * _HALO
    io = 2 * (c_in * lanes * in_itemsize + c_out * tile_t * in_itemsize)
    tmp = (c_in * lanes * in_itemsize                       # masked window
           + (2 * k * c_in + 2) * tile_t * mm_itemsize      # shifted taps + stacked RHS
           + 3 * c_out * tile_t * 4)                         # f32 acc / centered / out
    weights = c_out * (k * c_in + 1) * mm_itemsize + c_out * 2 * 4
    return io + tmp + weights


def _pick_tile_t(batch, seq, c_in, c_out, k, in_itemsize, mm_itemsize):
    # Largest lane-dense (x128) tile that stays inside a VMEM budget safe even
    # for v7x (64 MiB physical / 32 MiB scoped default), never much larger than
    # the sequence, and small enough that B == 1 still produces >= 2 grid steps
    # so both v7x TensorCores get work.
    budget = 20 * 1024 * 1024
    cap = min(2048, _round_up(seq, _HALO))
    if batch == 1 and seq > _HALO:
        cap = min(cap, _round_up(pl.cdiv(seq, 2), _HALO))
    for cand in (2048, 1024, 512, 256, 128):
        if cand <= cap and _vmem_estimate(cand, c_in, c_out, k,
                                          in_itemsize, mm_itemsize) <= budget:
            return cand
    return _HALO


def conv_relu_norm(signal, weight, bias, gamma, beta, *, eps=1e-5, tile_t=None,
                   use_bf16_matmul=True, vmem_limit_bytes=None):
    """signal: (B, C_in, T) NCT; weight: (C_out, C_in, K); bias/gamma/beta: (C_out,).

    Returns (B, C_out, T) NCT, same dtype as `signal`, matching the PyTorch
    module Conv1d(padding=K//2) -> ReLU -> LayerNorm(C_out) -> Dropout (eval).
    `use_bf16_matmul=True` casts matmul operands of f32 inputs to bf16 (f32
    accumulation) for MXU throughput; set False for an exact-f32 conv.
    """
    B, C_in, T = signal.shape
    C_out, C_in_w, K = weight.shape
    assert C_in_w == C_in
    if K % 2 != 1:
        raise ValueError(
            "ConvReLUNorm Pallas kernel requires odd kernel_size: PyTorch Conv1d "
            "with padding=K//2 changes the output length for even K.")
    pad = K // 2
    if pad > _HALO:
        raise ValueError(f"kernel_size={K} exceeds halo width {_HALO}")

    in_dt = jnp.dtype(signal.dtype)
    mm_dtype = (jnp.dtype(jnp.bfloat16)
                if (use_bf16_matmul and in_dt == jnp.dtype(jnp.float32))
                else in_dt)

    if tile_t is None:
        tile_t = _pick_tile_t(B, T, C_in, C_out, K, in_dt.itemsize, mm_dtype.itemsize)
    if tile_t % _HALO != 0:
        raise ValueError("tile_t must be a multiple of 128")

    n_t = pl.cdiv(T, tile_t)
    hb = tile_t // _HALO                       # 128-lane blocks per time tile
    last_lane_block = pl.cdiv(T, _HALO) - 1    # last in-bounds 128-lane block

    # Conv taps reshaped for the folded matmul; bias appended as an extra
    # contraction row (multiplied by an in-kernel ones row).
    w2 = jnp.transpose(weight, (0, 2, 1)).reshape(C_out, K * C_in)
    w_packed = jnp.concatenate([w2, bias.reshape(C_out, 1)], axis=1).astype(mm_dtype)
    params = jnp.stack([gamma, beta], axis=1).astype(jnp.float32)   # (C_out, 2)

    if vmem_limit_bytes is None:
        est = _vmem_estimate(tile_t, C_in, C_out, K, in_dt.itemsize, mm_dtype.itemsize)
        vmem_limit_bytes = int(min(max(2 * est, 32 * 1024 * 1024), 48 * 1024 * 1024))

    kernel = functools.partial(_conv_relu_norm_kernel, K=K, pad=pad, eps=eps,
                               seq_len=T, mm_dtype=mm_dtype)

    return pl.pallas_call(
        kernel,
        out_shape=jax.ShapeDtypeStruct((B, C_out, T), signal.dtype),
        grid_spec=pltpu.PrefetchScalarGridSpec(
            num_scalar_prefetch=0,
            grid=(B, n_t),
            in_specs=[
                # Left halo: previous 128 lanes (clamped to block 0; the kernel
                # masks the represented [-128, 0) lanes of the first tile).
                pl.BlockSpec((1, C_in, _HALO),
                             lambda b, j: (b, 0, jnp.maximum(j * hb - 1, 0))),
                # Current time tile.
                pl.BlockSpec((1, C_in, tile_t), lambda b, j: (b, 0, j)),
                # Right halo: next 128 lanes (clamped to the last in-bounds
                # block; the kernel masks lanes >= T).
                pl.BlockSpec((1, C_in, _HALO),
                             lambda b, j: (b, 0, jnp.minimum((j + 1) * hb,
                                                             last_lane_block))),
                # Grid-invariant packed conv weights and LayerNorm affine params.
                pl.BlockSpec((C_out, K * C_in + 1), lambda b, j: (0, 0)),
                pl.BlockSpec((C_out, 2), lambda b, j: (0, 0)),
            ],
            out_specs=pl.BlockSpec((1, C_out, tile_t), lambda b, j: (b, 0, j)),
        ),
        compiler_params=pltpu.CompilerParams(
            dimension_semantics=("parallel", "parallel"),
            vmem_limit_bytes=vmem_limit_bytes),
    )(signal, signal, signal, w_packed, params)


def _reference(signal, weight, bias, gamma, beta, eps=1e-5):
    """Pure-JAX mirror of the PyTorch forward (high-precision conv for the check)."""
    pad = weight.shape[-1] // 2
    y = jax.lax.conv_general_dilated(
        signal.astype(jnp.float32), weight.astype(jnp.float32),
        window_strides=(1,), padding=[(pad, pad)],
        dimension_numbers=("NCH", "OIH", "NCH"),
        precision=jax.lax.Precision.HIGHEST)
    y = jnp.maximum(y + bias.astype(jnp.float32)[None, :, None], 0.0)
    mean = jnp.mean(y, axis=1, keepdims=True)
    var = jnp.mean((y - mean) ** 2, axis=1, keepdims=True)
    out = (y - mean) * jax.lax.rsqrt(var + eps)
    out = (out * gamma.astype(jnp.float32)[None, :, None]
           + beta.astype(jnp.float32)[None, :, None])
    return out.astype(signal.dtype)


if __name__ == "__main__":
    def make_inputs(key, B, C_in, C_out, K, T):
        k_sig, k_w, k_b, k_g, k_be = jax.random.split(key, 5)
        signal = jax.random.normal(k_sig, (B, C_in, T), dtype=jnp.float32)
        weight = jax.random.normal(k_w, (C_out, C_in, K), dtype=jnp.float32) * 0.3
        bias = jax.random.normal(k_b, (C_out,), dtype=jnp.float32) * 0.1
        gamma = 1.0 + 0.1 * jax.random.normal(k_g, (C_out,), dtype=jnp.float32)
        beta = 0.1 * jax.random.normal(k_be, (C_out,), dtype=jnp.float32)
        return signal, weight, bias, gamma, beta

    # 1) Module-sized config (B=2, C_in=4, C_out=8, K=3, T=16), exact f32 matmul.
    args = make_inputs(jax.random.PRNGKey(0), 2, 4, 8, 3, 16)
    out = jax.block_until_ready(conv_relu_norm(*args, use_bf16_matmul=False))
    ref = _reference(*args)
    assert out.shape == ref.shape and out.dtype == args[0].dtype
    assert jnp.allclose(out, ref, atol=1e-4, rtol=1e-4), \
        float(jnp.max(jnp.abs(out - ref)))

    # 2) Same config through the default bf16-operand MXU path (loose tolerance:
    #    bf16 operand rounding, f32 accumulation).
    out_bf16 = jax.block_until_ready(conv_relu_norm(*args))
    assert jnp.allclose(out_bf16, ref, atol=1e-1, rtol=1e-1), \
        float(jnp.max(jnp.abs(out_bf16 - ref)))

    # 3) Multi-tile + ragged tail + halo/mask paths (T=200, tile_t=128), and the
    #    module's default kernel_size=1 config.  Exact matmul, tight tolerance.
    key2, key3 = jax.random.split(jax.random.PRNGKey(1))
    args2 = make_inputs(key2, 2, 4, 8, 3, 200)
    out2 = jax.block_until_ready(
        conv_relu_norm(*args2, tile_t=128, use_bf16_matmul=False))
    assert jnp.allclose(out2, _reference(*args2), atol=1e-4, rtol=1e-4), \
        float(jnp.max(jnp.abs(out2 - _reference(*args2))))

    args3 = make_inputs(key3, 2, 4, 8, 1, 16)
    out3 = jax.block_until_ready(conv_relu_norm(*args3, use_bf16_matmul=False))
    assert jnp.allclose(out3, _reference(*args3), atol=1e-4, rtol=1e-4), \
        float(jnp.max(jnp.abs(out3 - _reference(*args3))))

    print("KERNEL_OK")
</pallas_src>

<mosaic_0001>
module attributes {stable_mosaic.version = 11 : i64} {
  func.func @_conv_relu_norm_kernel(%arg0: i32, %arg1: i32, %arg2: memref<1x4x128xf32, #tpu.memory_space<vmem>>, %arg3: memref<1x4x128xf32, #tpu.memory_space<vmem>>, %arg4: memref<1x4x128xf32, #tpu.memory_space<vmem>>, %arg5: memref<8x13xf32, #tpu.memory_space<vmem>>, %arg6: memref<8x2xf32, #tpu.memory_space<vmem>>, %arg7: memref<1x8x128xf32, #tpu.memory_space<vmem>>) attributes {dimension_semantics = [#tpu.dimension_semantics<parallel>, #tpu.dimension_semantics<parallel>], iteration_bounds = array<i64: 2, 1>, scalar_prefetch = 0 : i64, scratch_operands = 0 : i64, tpu.core_type = #tpu.core_type<tc>, window_params = [{transform_indices = @transform_0, window_bounds = array<i64: 1, 4, 128>}, {transform_indices = @transform_1, window_bounds = array<i64: 1, 4, 128>}, {transform_indices = @transform_2, window_bounds = array<i64: 1, 4, 128>}, {pipeline_mode = #tpu.pipeline_mode<synchronous>, transform_indices = @transform_3, window_bounds = array<i64: 8, 13>}, {pipeline_mode = #tpu.pipeline_mode<synchronous>, transform_indices = @transform_4, window_bounds = array<i64: 8, 2>}, {transform_indices = @transform_5, window_bounds = array<i64: 1, 8, 128>}]} {
    %c0 = arith.constant 0 : index
    %c0_0 = arith.constant 0 : index
    %c0_1 = arith.constant 0 : index
    %0 = vector.load %arg2[%c0, %c0_0, %c0_1] : memref<1x4x128xf32, #tpu.memory_space<vmem>>, vector<1x4x128xf32>
    %1 = vector.shape_cast %0 : vector<1x4x128xf32> to vector<4x128xf32>
    %c0_2 = arith.constant 0 : index
    %c0_3 = arith.constant 0 : index
    %c0_4 = arith.constant 0 : index
    %2 = vector.load %arg3[%c0_2, %c0_3, %c0_4] : memref<1x4x128xf32, #tpu.memory_space<vmem>>, vector<1x4x128xf32>
    %3 = vector.shape_cast %2 : vector<1x4x128xf32> to vector<4x128xf32>
    %c0_5 = arith.constant 0 : index
    %c0_6 = arith.constant 0 : index
    %c0_7 = arith.constant 0 : index
    %4 = vector.load %arg4[%c0_5, %c0_6, %c0_7] : memref<1x4x128xf32, #tpu.memory_space<vmem>>, vector<1x4x128xf32>
    %5 = vector.shape_cast %4 : vector<1x4x128xf32> to vector<4x128xf32>
    %6 = tpu.concatenate %1, %3, %5 in 1 : vector<4x128xf32>, vector<4x128xf32>, vector<4x128xf32> -> vector<4x384xf32>
    %7 = tpu.iota {dimensions = array<i32: 1>} : vector<1x384xi32>
    %c128_i32 = arith.constant 128 : i32
    %8 = arith.muli %arg1, %c128_i32 : i32
    %c128_i32_8 = arith.constant 128 : i32
    %9 = arith.subi %8, %c128_i32_8 : i32
    %10 = vector.broadcast %9 : i32 to vector<1x384xi32>
    %11 = arith.addi %7, %10 : vector<1x384xi32>
    %c0_i32 = arith.constant 0 : i32
    %12 = vector.broadcast %c0_i32 : i32 to vector<1x384xi32>
    %13 = arith.cmpi sge, %11, %12 : vector<1x384xi32>
    %c16_i32 = arith.constant 16 : i32
    %14 = vector.broadcast %c16_i32 : i32 to vector<1x384xi32>
    %15 = arith.cmpi slt, %11, %14 : vector<1x384xi32>
    %16 = arith.andi %13, %15 : vector<1x384xi1>
    %c0_i32_9 = arith.constant 0 : i32
    %17 = arith.sitofp %c0_i32_9 : i32 to f32
    %18 = vector.shape_cast %16 : vector<1x384xi1> to vector<1x384xi1>
    %19 = vector.broadcast %18 : vector<1x384xi1> to vector<4x384xi1>
    %20 = vector.broadcast %17 : f32 to vector<4x384xf32>
    %21 = arith.select %19, %6, %20 : vector<4x384xi1>, vector<4x384xf32>
    %c257_i32 = arith.constant 257 : i32
    %22 = tpu.dynamic_rotate %21 by %c257_i32 dim 1 : vector<4x384xf32>, i32 -> vector<4x384xf32>
    %23 = vector.extract_strided_slice %22 {offsets = [0, 0], sizes = [4, 128], strides = [1, 1]} : vector<4x384xf32> to vector<4x128xf32>
    %24 = vector.extract_strided_slice %21 {offsets = [0, 128], sizes = [4, 128], strides = [1, 1]} : vector<4x384xf32> to vector<4x128xf32>
    %c255_i32 = arith.constant 255 : i32
    %25 = tpu.dynamic_rotate %21 by %c255_i32 dim 1 : vector<4x384xf32>, i32 -> vector<4x384xf32>
    %26 = vector.extract_strided_slice %25 {offsets = [0, 0], sizes = [4, 128], strides = [1, 1]} : vector<4x384xf32> to vector<4x128xf32>
    %cst = arith.constant 1.000000e+00 : f32
    %27 = vector.broadcast %cst : f32 to vector<1x128xf32>
    %28 = tpu.concatenate %23, %24, %26, %27 in 0 : vector<4x128xf32>, vector<4x128xf32>, vector<4x128xf32>, vector<1x128xf32> -> vector<13x128xf32>
    %c0_10 = arith.constant 0 : index
    %c0_11 = arith.constant 0 : index
    %29 = vector.load %arg5[%c0_10, %c0_11] : memref<8x13xf32, #tpu.memory_space<vmem>>, vector<8x13xf32>
    %cst_12 = arith.constant dense<0.000000e+00> : vector<8x128xf32>
    %30 = tpu.matmul %29, %28, %cst_12 {dimension_numbers = #tpu.dot_dimension_numbers<[1], [0], [0], [1], [0, 0, 1, 1], [], []>} : vector<8x13xf32>, vector<13x128xf32>, vector<8x128xf32> -> vector<8x128xf32>
    %cst_13 = arith.constant 0.000000e+00 : f32
    %31 = vector.broadcast %cst_13 : f32 to vector<8x128xf32>
    %32 = arith.maximumf %30, %31 : vector<8x128xf32>
    %c0_14 = arith.constant 0 : index
    %c0_15 = arith.constant 0 : index
    %33 = vector.load %arg6[%c0_14, %c0_15] : memref<8x2xf32, #tpu.memory_space<vmem>>, vector<8x1xf32>
    %c0_16 = arith.constant 0 : index
    %c1 = arith.constant 1 : index
    %34 = vector.load %arg6[%c0_16, %c1] : memref<8x2xf32, #tpu.memory_space<vmem>>, vector<8x1xf32>
    %cst_17 = arith.constant dense<0.000000e+00> : vector<128xf32>
    %35 = vector.multi_reduction <add>, %32, %cst_17 [0] : vector<8x128xf32> to vector<128xf32>
    %36 = vector.shape_cast %35 : vector<128xf32> to vector<1x128xf32>
    %cst_18 = arith.constant 1.250000e-01 : f32
    %37 = vector.broadcast %cst_18 : f32 to vector<1x128xf32>
    %38 = arith.mulf %36, %37 : vector<1x128xf32>
    %39 = vector.broadcast %38 : vector<1x128xf32> to vector<8x128xf32>
    %40 = arith.subf %32, %39 : vector<8x128xf32>
    %41 = arith.mulf %40, %40 : vector<8x128xf32>
    %cst_19 = arith.constant dense<0.000000e+00> : vector<128xf32>
    %42 = vector.multi_reduction <add>, %41, %cst_19 [0] : vector<8x128xf32> to vector<128xf32>
    %43 = vector.shape_cast %42 : vector<128xf32> to vector<1x128xf32>
    %cst_20 = arith.constant 1.250000e-01 : f32
    %44 = vector.broadcast %cst_20 : f32 to vector<1x128xf32>
    %45 = arith.mulf %43, %44 : vector<1x128xf32>
    %cst_21 = arith.constant 9.99999974E-6 : f32
    %46 = vector.broadcast %cst_21 : f32 to vector<1x128xf32>
    %47 = arith.addf %45, %46 : vector<1x128xf32>
    %48 = math.rsqrt %47 : vector<1x128xf32>
    %49 = vector.broadcast %48 : vector<1x128xf32> to vector<8x128xf32>
    %50 = arith.mulf %40, %49 : vector<8x128xf32>
    %51 = vector.broadcast %33 : vector<8x1xf32> to vector<8x128xf32>
    %52 = arith.mulf %50, %51 : vector<8x128xf32>
    %53 = vector.broadcast %34 : vector<8x1xf32> to vector<8x128xf32>
    %54 = arith.addf %52, %53 : vector<8x128xf32>
    %c0_22 = arith.constant 0 : index
    %c0_23 = arith.constant 0 : index
    %c0_24 = arith.constant 0 : index
    %55 = vector.load %arg7[%c0_22, %c0_23, %c0_24] : memref<1x8x128xf32, #tpu.memory_space<vmem>>, vector<1x8x128xf32>
    %56 = vector.shape_cast %55 : vector<1x8x128xf32> to vector<8x128xf32>
    %57 = vector.shape_cast %54 : vector<8x128xf32> to vector<1x8x128xf32>
    tpu.vector_store %arg7[%c0_22, %c0_23, %c0_24], %57 {strides = array<i32>} : memref<1x8x128xf32, #tpu.memory_space<vmem>>, vector<1x8x128xf32>,
    return
  }
  func.func @transform_0(%arg0: i32, %arg1: i32) -> (i32, i32, i32) {
    %c1_i32 = arith.constant 1 : i32
    %0 = arith.muli %arg1, %c1_i32 : i32
    %c1_i32_0 = arith.constant 1 : i32
    %1 = arith.subi %0, %c1_i32_0 : i32
    %c0_i32 = arith.constant 0 : i32
    %2 = arith.maxsi %1, %c0_i32 : i32
    %c0_i32_1 = arith.constant 0 : i32
    %c0_i32_2 = arith.constant 0 : i32
    return %arg0, %c0_i32_1, %2 : i32, i32, i32
  }
  func.func @transform_1(%arg0: i32, %arg1: i32) -> (i32, i32, i32) {
    %c0_i32 = arith.constant 0 : i32
    %c0_i32_0 = arith.constant 0 : i32
    return %arg0, %c0_i32, %arg1 : i32, i32, i32
  }
  func.func @transform_2(%arg0: i32, %arg1: i32) -> (i32, i32, i32) {
    %c1_i32 = arith.constant 1 : i32
    %0 = arith.addi %arg1, %c1_i32 : i32
    %c1_i32_0 = arith.constant 1 : i32
    %1 = arith.muli %0, %c1_i32_0 : i32
    %c0_i32 = arith.constant 0 : i32
    %2 = arith.minsi %1, %c0_i32 : i32
    %c0_i32_1 = arith.constant 0 : i32
    %c0_i32_2 = arith.constant 0 : i32
    return %arg0, %c0_i32_1, %2 : i32, i32, i32
  }
  func.func @transform_3(%arg0: i32, %arg1: i32) -> (i32, i32) {
    %c0_i32 = arith.constant 0 : i32
    %c0_i32_0 = arith.constant 0 : i32
    %c0_i32_1 = arith.constant 0 : i32
    return %c0_i32, %c0_i32_0 : i32, i32
  }
  func.func @transform_4(%arg0: i32, %arg1: i32) -> (i32, i32) {
    %c0_i32 = arith.constant 0 : i32
    %c0_i32_0 = arith.constant 0 : i32
    %c0_i32_1 = arith.constant 0 : i32
    return %c0_i32, %c0_i32_0 : i32, i32
  }
  func.func @transform_5(%arg0: i32, %arg1: i32) -> (i32, i32, i32) {
    %c0_i32 = arith.constant 0 : i32
    %c0_i32_0 = arith.constant 0 : i32
    return %arg0, %c0_i32, %arg1 : i32, i32, i32
  }
}

</mosaic_0001>

<llo_original>
// kernel: tpu_custom_call.1
$region0: #{tpu_custom_call.1}
  #allocation0 [shape = 'u32[]', space=smem, size = 0x4, offset = 0x4, fixed_abs, tag = 'smem constant byte address 0x4 - core index']
  #allocation1 [shape = 'u32[144,128]{1,0:T(1,128)}', space=vmem, size = 0x12000, scoped, tag = 'internal scratch']
  %s0 = inlined_call_operand.vmem [shape: f32[2,4,16], index: 0, kind: input, shape index: {}]
  %s1 = inlined_call_operand.hbm [shape: f32[2,4,16], index: 1, kind: input, shape index: {}]
  %s2 = inlined_call_operand.vmem [shape: f32[2,4,16], index: 2, kind: input, shape index: {}]
  %s3 = inlined_call_operand.hbm [shape: f32[8,13], index: 3, kind: input, shape index: {}]
  %s4 = inlined_call_operand.vmem [shape: f32[8,2], index: 4, kind: input, shape index: {}]
  %s5 = inlined_call_operand.hbm [shape: f32[2,8,16], index: 5, kind: output, shape index: {}]
  %s6 = sld [smem:[#allocation0]]
  $region61: #{tpu_custom_call.1} parent=0
    _
  %s8 = ssub.s32 1, %s6
  %s9 = scalar_select 0, %s8, %s6
  $region1: #{tpu_custom_call.1} parent=0
    #allocation2 [shape = 'u8[4096]{0}', space=vmem, size = 0x1000, scoped, tag = 'input window, operand 1']
    #allocation3 [shape = 's32[2]{0}', space=sflag, size = 0x8, scoped, tag = 'scoped memory for tpu_custom_call.1']
    #allocation4 [shape = 's32[2]{0}', space=sflag, size = 0x8, scoped, tag = 'scoped memory for tpu_custom_call.1']
    #allocation5 [shape = 'u8[4096]{0}', space=vmem, size = 0x1000, scoped, tag = 'input window, operand 3, single buffered']
    #allocation6 [shape = 's32[1]{0}', space=sflag, size = 0x4, scoped, tag = 'scoped memory for tpu_custom_call.1']
    #allocation7 [shape = 'u8[8192]{0}', space=vmem, size = 0x2000, scoped, tag = 'output window, operand 0']
    %10 = vsyncpa [#allocation3], 0
    %s11 = scalar_lea.sflag [#allocation3], 1
    %12 = vsyncpa %s11, 0
    %13 = vsyncpa [#allocation6], 0
    %14 = vsyncpa [#allocation4], 0
    %s15 = scalar_lea.sflag [#allocation4], 1
    %16 = vsyncpa %s15, 0
    loop: start=0, step=1, limit=4
    $region2: #{tpu_custom_call.1} parent=1 // loop_pre_header
      _
    $region3: #{tpu_custom_call.1} parent=1 // loop_header
      %s18 = sphi 0, %s22
      %p19 = scmp.ge.s32.totalorder %s18, 4
      %s25 = sphi 0, %s37
      %s26 = sphi 0, %s33
      %s27 = sphi 0, %s25
      %s28 = sphi 0, %s26
      %s29 = sphi 0, %s27
      %s30 = sphi 0, %s28
      %s48 = sphi 0, %s50
      %s51 = sphi 0, %s48
      %s52 = sphi 0, %s51
      %s68 = sphi 0, %s52
      %s76 = sphi 0, %s78
      %s79 = sphi 0, %s76
      %s80 = sphi 0, %s79
      %s96 = sphi 0, %s80
      %s110 = sphi 0, %s112
      %s113 = sphi 0, %s110
      %s114 = sphi 0, %s113
      %s130 = sphi 0, %s114
      %s134 = sphi 0, %s134
      %s136 = sphi 0, %s134
      %s137 = sphi 0, %s136
      %s151 = sphi 0, %s137
      %s155 = sphi 0, %s155
      %s157 = sphi 0, %s155
      %s158 = sphi 0, %s157
      %s172 = sphi 0, %s158
      %s180 = sphi 0, %s182
      %s183 = sphi 0, %s180
      %s184 = sphi 0, %s183
      %s200 = sphi 0, %s184
    $region4: #{tpu_custom_call.1} parent=1 // loop_header_branch
      %21 = sbr.rel (%p19) target = $region8
    $region5: #{tpu_custom_call.1} parent=1 // loop_body
      %s23 = ssub.s32 %s18, 1
      %s24 = ssub.s32 %s18, 2
      %s31 = sadd.s32 1, %s26
      %p32 = scmp.ge.s32.totalorder %s31, 1
      %s33 = scalar_select %p32, 0, %s31
      %s34 = sadd.s32 1, %s25
      %s35 = scalar_select %p32, %s34, %s25
      %p36 = scmp.ge.s32.totalorder %s35, 2
      %s37 = scalar_select %p36, 0, %s35
      %s38 = ssub.s32 %s26, 1
      %p39 = scmp.gt.s32.totalorder %s38, 0
      %s40 = scalar_select %p39, %s38, 0
      %s41 = ssub.s32 %s33, 1
      %p42 = scmp.gt.s32.totalorder %s41, 0
      %s43 = scalar_select %p42, %s41, 0
      %s44 = ssub.s32 %s25, %s37
      %s45 = ssub.s32 %s40, %s43
      %s46 = sor.u32 %s44, %s45
      %p47 = scmp.eq.s32.totalorder %s46, 0
      %s49 = sadd.s32 %s48, 1
      %s50 = scalar_select %p47, %s48, %s49
      %p53 = pneg %p47
      %p54 = scmp.eq.s32.totalorder %s18, 1
      %p55 = por %p53, %p54
      %p56 = scmp.ne.s32.totalorder %s48, %s51
      %p57 = scmp.eq.s32.totalorder %s18, 0
      %p58 = por %p56, %p57
      %p59 = scmp.ne.s32.totalorder %s48, %s51
      %p60 = scmp.eq.s32.totalorder %s23, 1
      %p61 = por %p59, %p60
      %p62 = scmp.ne.s32.totalorder %s51, %s52
      %p63 = scmp.eq.s32.totalorder %s23, 0
      %p64 = por %p62, %p63
      %p65 = scmp.ne.s32.totalorder %s51, %s52
      %p66 = scmp.eq.s32.totalorder %s24, 1
      %p67 = por %p65, %p66
      %p69 = scmp.ne.s32.totalorder %s52, %s68
      %p70 = scmp.eq.s32.totalorder %s24, 0
      %p71 = por %p69, %p70
      %s72 = ssub.s32 %s25, %s37
      %s73 = ssub.s32 %s26, %s33
      %s74 = sor.u32 %s72, %s73
      %p75 = scmp.eq.s32.totalorder %s74, 0
      %s77 = sadd.s32 %s76, 1
      %s78 = scalar_select %p75, %s76, %s77
      %p81 = pneg %p75
      %p82 = scmp.eq.s32.totalorder %s18, 1
      %p83 = por %p81, %p82
      %p84 = scmp.ne.s32.totalorder %s76, %s79
      %p85 = scmp.eq.s32.totalorder %s18, 0
      %p86 = por %p84, %p85
      %p87 = scmp.ne.s32.totalorder %s76, %s79
      %p88 = scmp.eq.s32.totalorder %s23, 1
      %p89 = por %p87, %p88
      %p90 = scmp.ne.s32.totalorder %s79, %s80
      %p91 = scmp.eq.s32.totalorder %s23, 0
      %p92 = por %p90, %p91
      %p93 = scmp.ne.s32.totalorder %s79, %s80
      %p94 = scmp.eq.s32.totalorder %s24, 1
      %p95 = por %p93, %p94
      %p97 = scmp.ne.s32.totalorder %s80, %s96
      %p98 = scmp.eq.s32.totalorder %s24, 0
      %p99 = por %p97, %p98
      %s100 = sadd.s32 %s26, 1
      %p101 = scmp.lt.s32.totalorder %s100, 0
      %s102 = scalar_select %p101, %s100, 0
      %s103 = sadd.s32 %s33, 1
      %p104 = scmp.lt.s32.totalorder %s103, 0
      %s105 = scalar_select %p104, %s103, 0
      %s106 = ssub.s32 %s25, %s37
      %s107 = ssub.s32 %s102, %s105
      %s108 = sor.u32 %s106, %s107
      %p109 = scmp.eq.s32.totalorder %s108, 0
      %s111 = sadd.s32 %s110, 1
      %s112 = scalar_select %p109, %s110, %s111
      %p115 = pneg %p109
      %p116 = scmp.eq.s32.totalorder %s18, 1
      %p117 = por %p115, %p116
      %p118 = scmp.ne.s32.totalorder %s110, %s113
      %p119 = scmp.eq.s32.totalorder %s18, 0
      %p120 = por %p118, %p119
      %p121 = scmp.ne.s32.totalorder %s110, %s113
      %p122 = scmp.eq.s32.totalorder %s23, 1
      %p123 = por %p121, %p122
      %p124 = scmp.ne.s32.totalorder %s113, %s114
      %p125 = scmp.eq.s32.totalorder %s23, 0
      %p126 = por %p124, %p125
      %p127 = scmp.ne.s32.totalorder %s113, %s114
      %p128 = scmp.eq.s32.totalorder %s24, 1
      %p129 = por %p127, %p128
      %p131 = scmp.ne.s32.totalorder %s114, %s130
      %p132 = scmp.eq.s32.totalorder %s24, 0
      %p133 = por %p131, %p132
      %s135 = sadd.s32 %s134, 1
      %p138 = scmp.eq.s32.totalorder %s18, 1
      %p139 = scmp.ne.s32.totalorder %s134, %s136
      %p140 = scmp.eq.s32.totalorder %s18, 0
      %p141 = por %p139, %p140
      %p142 = scmp.ne.s32.totalorder %s134, %s136
      %p143 = scmp.eq.s32.totalorder %s23, 1
      %p144 = por %p142, %p143
      %p145 = scmp.ne.s32.totalorder %s136, %s137
      %p146 = scmp.eq.s32.totalorder %s23, 0
      %p147 = por %p145, %p146
      %p148 = scmp.ne.s32.totalorder %s136, %s137
      %p149 = scmp.eq.s32.totalorder %s24, 1
      %p150 = por %p148, %p149
      %p152 = scmp.ne.s32.totalorder %s137, %s151
      %p153 = scmp.eq.s32.totalorder %s24, 0
      %p154 = por %p152, %p153
      %s156 = sadd.s32 %s155, 1
      %p159 = scmp.eq.s32.totalorder %s18, 1
      %p160 = scmp.ne.s32.totalorder %s155, %s157
      %p161 = scmp.eq.s32.totalorder %s18, 0
      %p162 = por %p160, %p161
      %p163 = scmp.ne.s32.totalorder %s155, %s157
      %p164 = scmp.eq.s32.totalorder %s23, 1
      %p165 = por %p163, %p164
      %p166 = scmp.ne.s32.totalorder %s157, %s158
      %p167 = scmp.eq.s32.totalorder %s23, 0
      %p168 = por %p166, %p167
      %p169 = scmp.ne.s32.totalorder %s157, %s158
      %p170 = scmp.eq.s32.totalorder %s24, 1
      %p171 = por %p169, %p170
      %p173 = scmp.ne.s32.totalorder %s158, %s172
      %p174 = scmp.eq.s32.totalorder %s24, 0
      %p175 = por %p173, %p174
      %s176 = ssub.s32 %s25, %s37
      %s177 = ssub.s32 %s26, %s33
      %s178 = sor.u32 %s176, %s177
      %p179 = scmp.eq.s32.totalorder %s178, 0
      %s181 = sadd.s32 %s180, 1
      %s182 = scalar_select %p179, %s180, %s181
      %p185 = pneg %p179
      %p186 = scmp.eq.s32.totalorder %s18, 1
      %p187 = por %p185, %p186
      %p188 = scmp.ne.s32.totalorder %s180, %s183
      %p189 = scmp.eq.s32.totalorder %s18, 0
      %p190 = por %p188, %p189
      %p191 = scmp.ne.s32.totalorder %s180, %s183
      %p192 = scmp.eq.s32.totalorder %s23, 1
      %p193 = por %p191, %p192
      %p194 = scmp.ne.s32.totalorder %s183, %s184
      %p195 = scmp.eq.s32.totalorder %s23, 0
      %p196 = por %p194, %p195
      %p197 = scmp.ne.s32.totalorder %s183, %s184
      %p198 = scmp.eq.s32.totalorder %s24, 1
      %p199 = por %p197, %p198
      %p201 = scmp.ne.s32.totalorder %s184, %s200
      %p202 = scmp.eq.s32.totalorder %s24, 0
      %p203 = por %p201, %p202
      %p204 = scmp.le.s32.totalorder 1, %s18
      %p205 = scmp.lt.s32.totalorder %s18, 3
      %p206 = pnand %p204, %p205
      %p207 = pneg %p206
      // Predicated region
      $region9: #{tpu_custom_call.1} parent=5 // pred_check
        _
      $region10: #{tpu_custom_call.1} parent=5 // pred_check_branch
        %209 = sbr.rel (%p206) target = $region12
      $region11: #{tpu_custom_call.1} parent=5 // pred_region
        %s210 = ssub.s32 %s18, 1
        // Predicated region
        $region13: #{tpu_custom_call.1} parent=11 // pred_check
          %p211 = pneg %p147
        $region14: #{tpu_custom_call.1} parent=11 // pred_check_branch
          %213 = sbr.rel (%p211) target = $region16
        $region15: #{tpu_custom_call.1} parent=11 // pred_region
          %s215 = ssub.s32 128, 128
          %216 = vsyncadd [#allocation6], %s215
          %s218 = sshll.u32 [#allocation5], 4
          %s219 = int_to_ptr.vmem [resolvable:$true] %s218
          %221 = dma.hbm_to_vmem [thread:$0]  %s3, 128, %s219, [#allocation6]
        $region16: #{tpu_custom_call.1} parent=11 // pred_fallthru
          _
        // Predicated region
        $region17: #{tpu_custom_call.1} parent=11 // pred_check
          %p222 = pneg %p168
        $region18: #{tpu_custom_call.1} parent=11 // pred_check_branch
          %224 = sbr.rel (%p222) target = $region20
        $region19: #{tpu_custom_call.1} parent=11 // pred_region
          _
        $region20: #{tpu_custom_call.1} parent=11 // pred_fallthru
          _
      $region12: #{tpu_custom_call.1} parent=5 // pred_fallthru
        _
      %p225 = scmp.lt.s32.totalorder %s18, 2
      // Predicated region
      $region21: #{tpu_custom_call.1} parent=5 // pred_check
        %p226 = pneg %p225
      $region22: #{tpu_custom_call.1} parent=5 // pred_check_branch
        %228 = sbr.rel (%p226) target = $region24
      $region23: #{tpu_custom_call.1} parent=5 // pred_region
        // Predicated region
        $region25: #{tpu_custom_call.1} parent=23 // pred_check
          %p229 = pneg %p58
        $region26: #{tpu_custom_call.1} parent=23 // pred_check_branch
          %231 = sbr.rel (%p229) target = $region28
        $region27: #{tpu_custom_call.1} parent=23 // pred_region
          %s232 = ssub.s32 %s26, 1
          %p233 = scmp.gt.s32.totalorder %s232, 0
          %s234 = scalar_select %p233, %s232, 0
          %p235 = scmp.lt.s32.totalorder %s25, 1
          %s236 = scalar_select %p235, %s25, 1
          %p237 = scmp.lt.s32.totalorder %s234, 0
          %s238 = scalar_select %p237, %s234, 0
          %s239 = sadd.s32 %s238, %s236
          %s240 = smul.addr %s239, 4
          %s241 = scalar_lea.vmem %s0, %s240
          %s242 = ssub.s32 %s26, 1
          %p243 = scmp.gt.s32.totalorder %s242, 0
          %s244 = scalar_select %p243, %s242, 0
        $region28: #{tpu_custom_call.1} parent=23 // pred_fallthru
          _
        // Predicated region
        $region29: #{tpu_custom_call.1} parent=23 // pred_check
          %p245 = pneg %p86
        $region30: #{tpu_custom_call.1} parent=23 // pred_check_branch
          %247 = sbr.rel (%p245) target = $region32
        $region31: #{tpu_custom_call.1} parent=23 // pred_region
          %s248 = sand.u32 %s76, 1
          %s249 = scalar_lea.sflag [#allocation3], %s248
          %s250 = sand.u32 %s76, 1
          %s251 = smul.addr %s250, 4
          %s252 = scalar_lea.vmem [#allocation2], %s251
          %s254 = ssub.s32 64, 64
          %255 = vsyncadd %s249, %s254
          %s256 = sadd.s32 %s26, %s25
          %s257 = smul.addr %s256, 64
          %s258 = scalar_lea.hbm %s1, %s257
          %s260 = sshll.u32 %s252, 4
          %s261 = int_to_ptr.vmem [resolvable:$true] %s260
          %263 = dma.hbm_to_vmem [thread:$0]  %s258, 64, %s261, %s249
        $region32: #{tpu_custom_call.1} parent=23 // pred_fallthru
          _
        // Predicated region
        $region33: #{tpu_custom_call.1} parent=23 // pred_check
          %p264 = pneg %p120
        $region34: #{tpu_custom_call.1} parent=23 // pred_check_branch
          %266 = sbr.rel (%p264) target = $region36
        $region35: #{tpu_custom_call.1} parent=23 // pred_region
          %s267 = sadd.s32 %s26, 1
          %p268 = scmp.lt.s32.totalorder %s267, 0
          %s269 = scalar_select %p268, %s267, 0
          %p270 = scmp.lt.s32.totalorder %s25, 1
          %s271 = scalar_select %p270, %s25, 1
          %p272 = scmp.lt.s32.totalorder %s269, 0
          %s273 = scalar_select %p272, %s269, 0
          %s274 = sadd.s32 %s273, %s271
          %s275 = smul.addr %s274, 4
          %s276 = scalar_lea.vmem %s2, %s275
          %s277 = sadd.s32 %s26, 1
          %p278 = scmp.lt.s32.totalorder %s277, 0
          %s279 = scalar_select %p278, %s277, 0
        $region36: #{tpu_custom_call.1} parent=23 // pred_fallthru
          _
      $region24: #{tpu_custom_call.1} parent=5 // pred_fallthru
        _
      %p280 = scmp.le.s32.totalorder 1, %s18
      %p281 = scmp.lt.s32.totalorder %s18, 3
      %p282 = pnand %p280, %p281
      %p283 = pneg %p282
      // Predicated region
      $region37: #{tpu_custom_call.1} parent=5 // pred_check
        _
      $region38: #{tpu_custom_call.1} parent=5 // pred_check_branch
        %285 = sbr.rel (%p282) target = $region40
      $region39: #{tpu_custom_call.1} parent=5 // pred_region
        %s286 = ssub.s32 %s18, 1
        %s287 = sand.u32 %s79, 1
        %s288 = scalar_lea.sflag [#allocation3], %s287
        %s289 = sand.u32 %s79, 1
        %s290 = smul.addr %s289, 4
        %s291 = scalar_lea.vmem [#allocation2], %s290
        // Predicated region
        $region41: #{tpu_custom_call.1} parent=39 // pred_check
          %p292 = pneg %p92
        $region42: #{tpu_custom_call.1} parent=39 // pred_check_branch
          %294 = sbr.rel (%p292) target = $region44
        $region43: #{tpu_custom_call.1} parent=39 // pred_region
          %295 = dma.done %s288, 64
        $region44: #{tpu_custom_call.1} parent=39 // pred_fallthru
          _
        // Predicated region
        $region45: #{tpu_custom_call.1} parent=39 // pred_check
          %p296 = pneg %p147
        $region46: #{tpu_custom_call.1} parent=39 // pred_check_branch
          %298 = sbr.rel (%p296) target = $region48
        $region47: #{tpu_custom_call.1} parent=39 // pred_region
          %299 = dma.done [#allocation6], 128
        $region48: #{tpu_custom_call.1} parent=39 // pred_fallthru
          _
        %s300 = ssub.s32 %s28, 1
        %p301 = scmp.gt.s32.totalorder %s300, 0
        %s302 = scalar_select %p301, %s300, 0
        %p303 = scmp.lt.s32.totalorder %s27, 1
        %s304 = scalar_select %p303, %s27, 1
        %p305 = scmp.lt.s32.totalorder %s302, 0
        %s306 = scalar_select %p305, %s302, 0
        %s307 = sadd.s32 %s306, %s304
        %s308 = smul.addr %s307, 4
        %s309 = scalar_lea.vmem %s0, %s308
        %p310 = pneg %p64
        %p311 = pneg %p61
        %s312 = sand.u32 %s79, 1
        %s313 = scalar_lea.sflag [#allocation3], %s312
        %s314 = sand.u32 %s79, 1
        %s315 = smul.addr %s314, 4
        %s316 = scalar_lea.vmem [#allocation2], %s315
        %p317 = pneg %p92
        %p318 = pneg %p89
        %s319 = sadd.s32 %s28, 1
        %p320 = scmp.lt.s32.totalorder %s319, 0
        %s321 = scalar_select %p320, %s319, 0
        %p322 = scmp.lt.s32.totalorder %s27, 1
        %s323 = scalar_select %p322, %s27, 1
        %p324 = scmp.lt.s32.totalorder %s321, 0
        %s325 = scalar_select %p324, %s321, 0
        %s326 = sadd.s32 %s325, %s323
        %s327 = smul.addr %s326, 4
        %s328 = scalar_lea.vmem %s2, %s327
        %p329 = pneg %p126
        %p330 = pneg %p123
        %p331 = pneg %p147
        %p332 = pneg %p144
        %p333 = pneg %p168
        %p334 = pneg %p165
        %p335 = pneg %p196
        %p336 = pneg %p193
        %s337 = sand.u32 %s183, 1
        %s338 = scalar_lea.sflag [#allocation4], %s337
        %s339 = sand.u32 %s183, 1
        %s340 = smul.addr %s339, 8
        %s341 = scalar_lea.vmem [#allocation7], %s340
        %s342 = ssub.s32 %s28, 1
        %p343 = scmp.gt.s32.totalorder %s342, 0
        %s344 = scalar_select %p343, %s342, 0
        %p345 = scmp.lt.s32.totalorder %s27, 1
        %s346 = scalar_select %p345, %s27, 1
        %p347 = scmp.lt.s32.totalorder %s344, 0
        %s348 = scalar_select %p347, %s344, 0
        %s349 = sadd.s32 %s348, %s346
        %s350 = smul.addr %s349, 4
        %s351 = scalar_lea.vmem %s0, %s350
        %s352 = ssub.s32 %s28, 1
        %p353 = scmp.gt.s32.totalorder %s352, 0
        %s354 = scalar_select %p353, %s352, 0
        %s355 = sadd.s32 %s28, 1
        %p356 = scmp.lt.s32.totalorder %s355, 0
        %s357 = scalar_select %p356, %s355, 0
        %p358 = scmp.lt.s32.totalorder %s27, 1
        %s359 = scalar_select %p358, %s27, 1
        %p360 = scmp.lt.s32.totalorder %s357, 0
        %s361 = scalar_select %p360, %s357, 0
        %s362 = sadd.s32 %s361, %s359
        %s363 = smul.addr %s362, 4
        %s364 = scalar_lea.vmem %s2, %s363
        %s365 = sadd.s32 %s28, 1
        %p366 = scmp.lt.s32.totalorder %s365, 0
        %s367 = scalar_select %p366, %s365, 0
        %v368 = vld [vmem:[%s351] sm:$0xf]
        %v369 = vld [vmem:[%s291] sm:$0xf]
        %v370 = vld [vmem:[%s364] sm:$0xf]
        %v371 = vlaneseq
        %v372 = vand.u32 %v371, 127
        %v373 = vadd.s32 %v372, 128
        %v374 = vadd.s32 %v372, 256
        %s375 = smul.u32 %s28, 128
        %s376 = ssub.s32 %s375, 128
        %v377 = vstv %s376
        %v378 = vadd.s32 %v372, %v377
        %v379 = vadd.s32 %v373, %v377
        %v380 = vadd.s32 %v374, %v377
        %vm381 = vcmp.ge.s32.totalorder %v378, 0
        %vm382 = vcmp.ge.s32.totalorder %v379, 0
        %vm383 = vcmp.ge.s32.totalorder %v380, 0
        %vm384 = vcmp.lt.s32.totalorder %v378, 16
        %vm385 = vcmp.lt.s32.totalorder %v379, 16
        %vm386 = vcmp.lt.s32.totalorder %v380, 16
        %vm387 = vmand %vm381, %vm384
        %vm388 = vmand %vm382, %vm385
        %vm389 = vmand %vm383, %vm386
        %v390 = vsel %vm387, 1, 0
        %v391 = vsel %vm388, 1, 0
        %v392 = vsel %vm389, 1, 0
        %vm393 = vcmp.eq.s32.totalorder %v390, 1
        %vm394 = vcmp.eq.s32.totalorder %v391, 1
        %vm395 = vcmp.eq.s32.totalorder %v392, 1
        %v396 = vsel %vm393, %v368, 0.0
        %v397 = vsel %vm394, %v369, 0.0
        %v398 = vsel %vm395, %v370, 0.0
        %399 = vrot.lane.b32.xlu0 %v396, 1
        %v400 = vpop.permute.xlu0 %399
        %401 = vrot.lane.b32.xlu0 %v397, 1
        %v402 = vpop.permute.xlu0 %401
        %vm403 = vcmp.lt.s32.totalorder %v372, 1
        %v404 = vsel %vm403, %v400, %v402
        %405 = vrot.lane.b32.xlu0 %v397, 127
        %v406 = vpop.permute.xlu0 %405
        %407 = vrot.lane.b32.xlu0 %v398, 127
        %v408 = vpop.permute.xlu0 %407
        %vm409 = vcmp.lt.s32.totalorder %v372, 127
        %v410 = vsel %vm409, %v406, %v408
        %v412 = vrot.slane %v397, 4
        %vm414 = vcmask 1043456
        %v415 = vsel %vm414, %v404, %v412
        %v416 = vsel %vm414, %v410, 1.0
        %v417 = vld [vmem:[#allocation5] sm:$0xff]
        %vm418 = vcmask 105472
        %v420 = vsel %vm418, %v417, 0
        %vm422 = vcmask 1044480
        %v424 = vsel %vm422, %v416, 0
        %426 = vmatprep.subr.mxu0 0.0
        %427 = vmatpush1.msra.mxu0 %v415
        %428 = vmatprep.subr.mxu0 0.0
        %429 = vmatpush1.msra.mxu0 %v424
        %430 = vmatprep.subr.mxu0 0.0
        %431 = vmatpush1.msra.mxu0 0.0
        %432 = vmatprep.subr.mxu0 0.0
        %433 = vmatpush1.msra.mxu0 0.0
        %434 = vmatprep.subr.mxu0 0.0
        %435 = vmatpush1.msra.mxu0 0.0
        %436 = vmatprep.subr.mxu0 0.0
        %437 = vmatpush1.msra.mxu0 0.0
        %438 = vmatprep.subr.mxu0 0.0
        %439 = vmatpush1.msra.mxu0 0.0
        %440 = vmatprep.subr.mxu0 0.0
        %441 = vmatpush1.msra.mxu0 0.0
        %442 = vmatprep.subr.mxu0 0.0
        %443 = vmatpush1.msra.mxu0 0.0
        %444 = vmatprep.subr.mxu0 0.0
        %445 = vmatpush1.msra.mxu0 0.0
        %446 = vmatprep.subr.mxu0 0.0
        %447 = vmatpush1.msra.mxu0 0.0
        %448 = vmatprep.subr.mxu0 0.0
        %449 = vmatpush1.msra.mxu0 0.0
        %450 = vmatprep.subr.mxu0 0.0
        %451 = vmatpush1.msra.mxu0 0.0
        %452 = vmatprep.subr.mxu0 0.0
        %453 = vmatpush1.msra.mxu0 0.0
        %454 = vmatprep.subr.mxu0 0.0
        %455 = vmatpush1.msra.mxu0 0.0
        %456 = vmatprep.subr.mxu0 0.0
        %457 = vmatpush1.msra.mxu0 0.0
        %458 = vmatprep.subr.mxu0 0.0
        %459 = vmatpush1.msra.mxu0 0.0
        %460 = vmatprep.subr.mxu0 0.0
        %461 = vmatpush1.msra.mxu0 0.0
        %462 = vmatprep.subr.mxu0 0.0
        %463 = vmatpush1.msra.mxu0 0.0
        %464 = vmatprep.subr.mxu0 0.0
        %465 = vmatpush1.msra.mxu0 0.0
        %466 = vmatprep.subr.mxu0 0.0
        %467 = vmatpush1.msra.mxu0 0.0
        %468 = vmatprep.subr.mxu0 0.0
        %469 = vmatpush1.msra.mxu0 0.0
        %470 = vmatprep.subr.mxu0 0.0
        %471 = vmatpush1.msra.mxu0 0.0
        %472 = vmatprep.subr.mxu0 0.0
        %473 = vmatpush1.msra.mxu0 0.0
        %474 = vmatprep.subr.mxu0 0.0
        %475 = vmatpush1.msra.mxu0 0.0
        %476 = vmatprep.subr.mxu0 0.0
        %477 = vmatpush1.msra.mxu0 0.0
        %478 = vmatprep.subr.mxu0 0.0
        %479 = vmatpush1.msra.mxu0 0.0
        %480 = vmatprep.subr.mxu0 0.0
        %481 = vmatpush1.msra.mxu0 0.0
        %482 = vmatprep.subr.mxu0 0.0
        %483 = vmatpush1.msra.mxu0 0.0
        %484 = vmatprep.subr.mxu0 0.0
        %485 = vmatpush1.msra.mxu0 0.0
        %486 = vmatprep.subr.mxu0 0.0
        %487 = vmatpush1.msra.mxu0 0.0
        %488 = vmatprep.subr.mxu0 0.0
        %489 = vmatpush1.msra.mxu0 0.0
        %490 = vmatprep.mubr.f32.mxu0 0.0
        %491 = vmatmul.mubr.f32.gmra.mrb[0].mxu0 %v420
        %v492 = vpop.f32.mrb[0].mxu0
        %v493 = vadd.f32 0.0, %v492
        %v494 = vpop.f32.mrb[0].mxu0
        %495 = vdwg.mxu0
        %v496 = vmax.f32 %v493, 0.0
        %v497 = vld [vmem:[%s4] sm:$0xff]
        %v498 = vrot.slane %v496, 4
        %v499 = vadd.f32 %v496, %v498
        %v500 = vrot.slane %v499, 2
        %v501 = vadd.f32 %v499, %v500
        %v502 = vrot.slane %v501, 1
        %v503 = vadd.f32 %v501, %v502
        %v504 = vmul.f32 %v503, 0.125
        %v505 = vsub.f32 %v496, %v504
        %v506 = vmul.f32 %v505, %v505
        %v507 = vrot.slane %v506, 4
        %v508 = vadd.f32 %v506, %v507
        %v509 = vrot.slane %v508, 2
        %v510 = vadd.f32 %v508, %v509
        %v511 = vrot.slane %v510, 1
        %v512 = vadd.f32 %v510, %v511
        %v513 = vmul.f32 %v512, 0.125
        %v514 = vadd.f32 %v513, 1e-05
        %v515 = vrsqrt.pop %v514
        %v516 = vmul.f32 %v505, %v515
        %518 = vset.pattern.permute.xlu0 0
        %519 = vperm.xlu0 %518, %v497
        %v520 = vpop.permute.xlu0 %519
        %v522 = vmul.f32 %v516, %v520
        %523 = vset.pattern.permute.xlu0 1
        %524 = vperm.xlu0 %523, %v497
        %v525 = vpop.permute.xlu0 %524
        %v527 = vadd.f32 %v522, %v525
        %528 = vst [vmem:[%s341] sm:$0xff] %v527
        %s529 = sand.u32 %s183, 1
        %s530 = scalar_lea.sflag [#allocation4], %s529
        %s531 = sand.u32 %s183, 1
        %s532 = smul.addr %s531, 8
        %s533 = scalar_lea.vmem [#allocation7], %s532
        // Predicated region
        $region49: #{tpu_custom_call.1} parent=39 // pred_check
          %p534 = pneg %p193
        $region50: #{tpu_custom_call.1} parent=39 // pred_check_branch
          %536 = sbr.rel (%p534) target = $region52
        $region51: #{tpu_custom_call.1} parent=39 // pred_region
          %s538 = ssub.s32 128, 128
          %539 = vsyncadd %s530, %s538
          %s540 = sadd.s32 %s28, %s27
          %s541 = smul.addr %s540, 128
          %s542 = scalar_lea.hbm %s5, %s541
          %s544 = sshll.u32 %s533, 4
          %s545 = int_to_ptr.vmem [resolvable:$true] %s544
          %547 = dma.vmem_to_hbm [thread:$0]  %s545, 128, %s542, %s530
        $region52: #{tpu_custom_call.1} parent=39 // pred_fallthru
          _
      $region40: #{tpu_custom_call.1} parent=5 // pred_fallthru
        _
      %p548 = scmp.le.s32.totalorder 2, %s18
      // Predicated region
      $region53: #{tpu_custom_call.1} parent=5 // pred_check
        %p549 = pneg %p548
      $region54: #{tpu_custom_call.1} parent=5 // pred_check_branch
        %551 = sbr.rel (%p549) target = $region56
      $region55: #{tpu_custom_call.1} parent=5 // pred_region
        %s552 = ssub.s32 %s18, 2
        // Predicated region
        $region57: #{tpu_custom_call.1} parent=55 // pred_check
          %p553 = pneg %p199
        $region58: #{tpu_custom_call.1} parent=55 // pred_check_branch
          %555 = sbr.rel (%p553) target = $region60
        $region59: #{tpu_custom_call.1} parent=55 // pred_region
          %s556 = sand.u32 %s184, 1
          %s557 = scalar_lea.sflag [#allocation4], %s556
          %s558 = sand.u32 %s184, 1
          %s559 = smul.addr %s558, 8
          %s560 = scalar_lea.vmem [#allocation7], %s559
          %561 = dma.done %s557, 128
        $region60: #{tpu_custom_call.1} parent=55 // pred_fallthru
          _
      $region56: #{tpu_custom_call.1} parent=5 // pred_fallthru
        _
    $region6: #{tpu_custom_call.1} parent=1 // loop_footer
      %s22 = sadd.s32 1, %s18
    $region7: #{tpu_custom_call.1} parent=1 // loop_footer_branch
      %17 = sbr.rel target = $region3
    $region8: #{tpu_custom_call.1} parent=1 // loop_exit
      _
    %562 = vsyncpa [#allocation3], 1
    %s563 = scalar_lea.sflag [#allocation3], 1
    %564 = vsyncpa %s563, 1
    %565 = vsyncpa [#allocation6], 1
    %566 = vsyncpa [#allocation4], 1
    %s567 = scalar_lea.sflag [#allocation4], 1
    %568 = vsyncpa %s567, 1

</llo_original>
